<compile_context>
chip_gen: v5e
topology: v5e:2x2
jax: 0.10.0
libtpu: 0.0.40
codegen_flags: <defaults>
</compile_context>

<pallas_src>
import functools

import jax
import jax.numpy as jnp
from jax.experimental import pallas as pl
from jax.experimental.pallas import tpu as pltpu


def _fccc_kernel(value_ref, cls_ref,
                 wc1_ref, bc1_ref, wc2_ref, bc2_ref,
                 w0_ref, b0_ref, w1_ref, b1_ref,
                 w2t_ref, b2t_ref, w2s_ref, b2s_ref,
                 trans_ref, scale_ref,
                 *, matmul_dtype):
    mm = matmul_dtype

    # Biases loaded once (hoisted; no implicit re-broadcast per use).
    bc1 = bc1_ref[...]
    bc2 = bc2_ref[...]
    b0 = b0_ref[...]
    b1 = b1_ref[...]

    # --- conditioning MLP ---
    # Linear(2, h): K=2 skinny matmul -> VPU broadcast-FMA (MXU would waste ~98%).
    cls = cls_ref[...]                       # (TB, 2) f32
    wc1 = wc1_ref[...]                       # (2, H)  f32
    cond = cls[:, 0:1] * wc1[0:1, :] + cls[:, 1:2] * wc1[1:2, :] + bc1
    cond = jnp.maximum(cond, 0.0)
    # Linear(h, h): MXU, low-precision inputs / f32 accumulation.
    cond = jnp.dot(cond.astype(mm), wc2_ref[...].astype(mm),
                   preferred_element_type=jnp.float32) + bc2
    cond = jnp.maximum(cond, 0.0)

    # --- fn[0] = Linear(nc, h): K=nc skinny matmul ---
    value = value_ref[...]                   # (TB, nc) f32
    w0 = w0_ref[...]                         # (nc, H)  f32
    nc = value.shape[1]
    if nc <= 16:
        # VPU broadcast-FMA sum (static unroll over the few input channels).
        p = b0
        for c in range(nc):
            p = p + value[:, c:c + 1] * w0[c:c + 1, :]
    else:
        p = jnp.dot(value.astype(mm), w0.astype(mm),
                    preferred_element_type=jnp.float32) + b0

    # fn[1] = ReLU applied to (p + cond)
    p = jnp.maximum(p + cond, 0.0)
    # fn[2] = Linear(h, h) applied to (p + cond)   (MXU)
    p = jnp.dot((p + cond).astype(mm), w1_ref[...].astype(mm),
                preferred_element_type=jnp.float32) + b1
    # fn[3] = ReLU applied to (p + cond)
    p = jnp.maximum(p + cond, 0.0)
    # fn[4] = Linear(h, 2*nc) applied to (p + cond), pre-split into halves
    h_in = (p + cond).astype(mm)
    trans = jnp.dot(h_in, w2t_ref[...].astype(mm),
                    preferred_element_type=jnp.float32) + b2t_ref[...]
    scale = jnp.dot(h_in, w2s_ref[...].astype(mm),
                    preferred_element_type=jnp.float32) + b2s_ref[...]

    trans_ref[...] = trans
    scale_ref[...] = jnp.tanh(scale)


def prepare_params(params, nc, lane=128):
    """One-time parameter prep (hoisted out of the call path).

    Transposes PyTorch-style (out, in) weights to (in, out), reshapes biases to
    (1, out), splits the final layer into translation/scale halves, and
    zero-pads the hidden dimension up to a multiple of 128 lanes.  The padding
    is numerically exact: padded hidden channels have zero weight & bias, so
    they stay zero through every ReLU / matmul.
    """
    h = params["wc1"].shape[0]
    hp = ((h + lane - 1) // lane) * lane
    ph = hp - h

    def pad_cols(x):   # (r, h) -> (r, hp)
        return jnp.pad(x, ((0, 0), (0, ph)))

    def pad_rows(x):   # (h, c) -> (hp, c)
        return jnp.pad(x, ((0, ph), (0, 0)))

    wc1 = pad_cols(params["wc1"].T)                 # (2, hp)
    bc1 = pad_cols(params["bc1"][None, :])          # (1, hp)
    wc2 = pad_cols(pad_rows(params["wc2"].T))       # (hp, hp)
    bc2 = pad_cols(params["bc2"][None, :])          # (1, hp)
    w0 = pad_cols(params["w0"].T)                   # (nc, hp)
    b0 = pad_cols(params["b0"][None, :])            # (1, hp)
    w1 = pad_cols(pad_rows(params["w1"].T))         # (hp, hp)
    b1 = pad_cols(params["b1"][None, :])            # (1, hp)
    w2 = pad_rows(params["w2"].T)                   # (hp, 2*nc)
    b2 = params["b2"][None, :]                      # (1, 2*nc)
    w2t, w2s = w2[:, :nc], w2[:, nc:]
    b2t, b2s = b2[:, :nc], b2[:, nc:]
    return (wc1, bc1, wc2, bc2, w0, b0, w1, b1, w2t, b2t, w2s, b2s)


def fccc_forward(value, cls, prepped, *, matmul_dtype=jnp.bfloat16,
                 batch_tile=512):
    """value: (B, nc) f32, cls: (B, 2) f32, prepped = prepare_params(...).

    Returns (translation, scale), each (B, nc) f32.
    """
    B, nc = value.shape
    weight_args = prepped

    # Batch tiling: single block if it fits, otherwise a pipelined grid of
    # batch_tile-row tiles (batch_tile is a multiple of 8 sublanes / 128 lanes).
    tb = B if B <= batch_tile else batch_tile
    grid = (pl.cdiv(B, tb),)

    def batch_spec(width):
        return pl.BlockSpec((tb, width), lambda i: (i, 0))

    def const_spec(shape):
        return pl.BlockSpec(shape, lambda i: (0, 0))

    in_specs = ([batch_spec(nc), batch_spec(2)]
                + [const_spec(w.shape) for w in weight_args])
    out_specs = (batch_spec(nc), batch_spec(nc))

    kernel = functools.partial(_fccc_kernel, matmul_dtype=matmul_dtype)

    return pl.pallas_call(
        kernel,
        grid=grid,
        out_shape=(jax.ShapeDtypeStruct((B, nc), jnp.float32),
                   jax.ShapeDtypeStruct((B, nc), jnp.float32)),
        in_specs=in_specs,
        out_specs=out_specs,
        compiler_params=pltpu.CompilerParams(
            dimension_semantics=("parallel",),
            vmem_limit_bytes=32 * 1024 * 1024),
    )(value, cls, *weight_args)


def fccc_reference(value, cls, params):
    """Pure-JAX f32 reference mirroring the PyTorch forward exactly."""
    def lin(x, w, b):  # PyTorch Linear: x @ W^T + b
        return x @ w.T + b
    cond = jax.nn.relu(lin(cls, params["wc1"], params["bc1"]))
    cond = jax.nn.relu(lin(cond, params["wc2"], params["bc2"]))
    p = lin(value, params["w0"], params["b0"])
    p = jax.nn.relu(p + cond)
    p = lin(p + cond, params["w1"], params["b1"])
    p = jax.nn.relu(p + cond)
    p = lin(p + cond, params["w2"], params["b2"])
    nc = value.shape[1]
    return p[:, :nc], jnp.tanh(p[:, nc:])


def init_params(key, nc, n_hidden):
    """PyTorch-default-style uniform(-1/sqrt(fan_in), 1/sqrt(fan_in)) init."""
    def linear(k, out_f, in_f):
        k1, k2 = jax.random.split(k)
        bound = 1.0 / jnp.sqrt(in_f)
        w = jax.random.uniform(k1, (out_f, in_f), jnp.float32, -bound, bound)
        b = jax.random.uniform(k2, (out_f,), jnp.float32, -bound, bound)
        return w, b

    keys = jax.random.split(key, 5)
    wc1, bc1 = linear(keys[0], n_hidden, 2)
    wc2, bc2 = linear(keys[1], n_hidden, n_hidden)
    w0, b0 = linear(keys[2], n_hidden, nc)
    w1, b1 = linear(keys[3], n_hidden, n_hidden)
    w2, b2 = linear(keys[4], 2 * nc, n_hidden)
    return dict(wc1=wc1, bc1=bc1, wc2=wc2, bc2=bc2,
                w0=w0, b0=b0, w1=w1, b1=b1, w2=w2, b2=b2)


if __name__ == "__main__":
    B, nc, n_hidden = 8, 4, 32   # small shapes; module default n_hidden=128 also works

    key = jax.random.PRNGKey(0)
    k_val, k_cls, k_par = jax.random.split(key, 3)
    value = jax.random.normal(k_val, (B, nc), jnp.float32)
    cls = jax.random.normal(k_cls, (B, 2), jnp.float32)
    params = init_params(k_par, nc, n_hidden)

    prepped = prepare_params(params, nc)   # one-time prep (transpose/pad/split)
    t_ref, s_ref = fccc_reference(value, cls, params)

    # f32 MXU path: bit-accurate against the reference (modulo reassociation).
    t32, s32 = fccc_forward(value, cls, prepped, matmul_dtype=jnp.float32)
    jax.block_until_ready((t32, s32))
    assert t32.shape == (B, nc) and s32.shape == (B, nc)
    assert jnp.allclose(t32, t_ref, atol=1e-4, rtol=1e-4)
    assert jnp.allclose(s32, s_ref, atol=1e-4, rtol=1e-4)

    # Default bf16-input / f32-accumulate MXU path (the fast path on v5e/v6e/v7x).
    translation, scale = fccc_forward(value, cls, prepped)
    jax.block_until_ready((translation, scale))
    assert translation.shape == (B, nc) and scale.shape == (B, nc)
    assert jnp.allclose(translation, t_ref, atol=1e-1, rtol=1e-1)
    assert jnp.allclose(scale, s_ref, atol=1e-1, rtol=1e-1)

    print("KERNEL_OK")
</pallas_src>

<mosaic_0001>
module attributes {stable_mosaic.version = 11 : i64} {
  func.func @_fccc_kernel(%arg0: i32, %arg1: memref<8x4xf32, #tpu.memory_space<vmem>>, %arg2: memref<8x2xf32, #tpu.memory_space<vmem>>, %arg3: memref<2x128xf32, #tpu.memory_space<vmem>>, %arg4: memref<1x128xf32, #tpu.memory_space<vmem>>, %arg5: memref<128x128xf32, #tpu.memory_space<vmem>>, %arg6: memref<1x128xf32, #tpu.memory_space<vmem>>, %arg7: memref<4x128xf32, #tpu.memory_space<vmem>>, %arg8: memref<1x128xf32, #tpu.memory_space<vmem>>, %arg9: memref<128x128xf32, #tpu.memory_space<vmem>>, %arg10: memref<1x128xf32, #tpu.memory_space<vmem>>, %arg11: memref<128x4xf32, #tpu.memory_space<vmem>>, %arg12: memref<1x4xf32, #tpu.memory_space<vmem>>, %arg13: memref<128x4xf32, #tpu.memory_space<vmem>>, %arg14: memref<1x4xf32, #tpu.memory_space<vmem>>, %arg15: memref<8x4xf32, #tpu.memory_space<vmem>>, %arg16: memref<8x4xf32, #tpu.memory_space<vmem>>) attributes {dimension_semantics = [#tpu.dimension_semantics<parallel>], iteration_bounds = array<i64: 1>, scalar_prefetch = 0 : i64, scratch_operands = 0 : i64, tpu.core_type = #tpu.core_type<tc>, window_params = [{transform_indices = @transform_0, window_bounds = array<i64: 8, 4>}, {transform_indices = @transform_1, window_bounds = array<i64: 8, 2>}, {pipeline_mode = #tpu.pipeline_mode<synchronous>, transform_indices = @transform_2, window_bounds = array<i64: 2, 128>}, {pipeline_mode = #tpu.pipeline_mode<synchronous>, transform_indices = @transform_3, window_bounds = array<i64: 1, 128>}, {pipeline_mode = #tpu.pipeline_mode<synchronous>, transform_indices = @transform_4, window_bounds = array<i64: 128, 128>}, {pipeline_mode = #tpu.pipeline_mode<synchronous>, transform_indices = @transform_5, window_bounds = array<i64: 1, 128>}, {pipeline_mode = #tpu.pipeline_mode<synchronous>, transform_indices = @transform_6, window_bounds = array<i64: 4, 128>}, {pipeline_mode = #tpu.pipeline_mode<synchronous>, transform_indices = @transform_7, window_bounds = array<i64: 1, 128>}, {pipeline_mode = #tpu.pipeline_mode<synchronous>, transform_indices = @transform_8, window_bounds = array<i64: 128, 128>}, {pipeline_mode = #tpu.pipeline_mode<synchronous>, transform_indices = @transform_9, window_bounds = array<i64: 1, 128>}, {pipeline_mode = #tpu.pipeline_mode<synchronous>, transform_indices = @transform_10, window_bounds = array<i64: 128, 4>}, {pipeline_mode = #tpu.pipeline_mode<synchronous>, transform_indices = @transform_11, window_bounds = array<i64: 1, 4>}, {pipeline_mode = #tpu.pipeline_mode<synchronous>, transform_indices = @transform_12, window_bounds = array<i64: 128, 4>}, {pipeline_mode = #tpu.pipeline_mode<synchronous>, transform_indices = @transform_13, window_bounds = array<i64: 1, 4>}, {transform_indices = @transform_14, window_bounds = array<i64: 8, 4>}, {transform_indices = @transform_15, window_bounds = array<i64: 8, 4>}]} {
    %c0 = arith.constant 0 : index
    %c0_0 = arith.constant 0 : index
    %0 = vector.load %arg4[%c0, %c0_0] : memref<1x128xf32, #tpu.memory_space<vmem>>, vector<1x128xf32>
    %c0_1 = arith.constant 0 : index
    %c0_2 = arith.constant 0 : index
    %1 = vector.load %arg6[%c0_1, %c0_2] : memref<1x128xf32, #tpu.memory_space<vmem>>, vector<1x128xf32>
    %c0_3 = arith.constant 0 : index
    %c0_4 = arith.constant 0 : index
    %2 = vector.load %arg8[%c0_3, %c0_4] : memref<1x128xf32, #tpu.memory_space<vmem>>, vector<1x128xf32>
    %c0_5 = arith.constant 0 : index
    %c0_6 = arith.constant 0 : index
    %3 = vector.load %arg10[%c0_5, %c0_6] : memref<1x128xf32, #tpu.memory_space<vmem>>, vector<1x128xf32>
    %c0_7 = arith.constant 0 : index
    %c0_8 = arith.constant 0 : index
    %4 = vector.load %arg2[%c0_7, %c0_8] : memref<8x2xf32, #tpu.memory_space<vmem>>, vector<8x2xf32>
    %c0_9 = arith.constant 0 : index
    %c0_10 = arith.constant 0 : index
    %5 = vector.load %arg3[%c0_9, %c0_10] : memref<2x128xf32, #tpu.memory_space<vmem>>, vector<2x128xf32>
    %6 = vector.extract_strided_slice %4 {offsets = [0, 0], sizes = [8, 1], strides = [1, 1]} : vector<8x2xf32> to vector<8x1xf32>
    %7 = vector.extract_strided_slice %5 {offsets = [0, 0], sizes = [1, 128], strides = [1, 1]} : vector<2x128xf32> to vector<1x128xf32>
    %8 = vector.broadcast %6 : vector<8x1xf32> to vector<8x128xf32>
    %9 = vector.broadcast %7 : vector<1x128xf32> to vector<8x128xf32>
    %10 = arith.mulf %8, %9 : vector<8x128xf32>
    %11 = vector.extract_strided_slice %4 {offsets = [0, 1], sizes = [8, 1], strides = [1, 1]} : vector<8x2xf32> to vector<8x1xf32>
    %12 = vector.extract_strided_slice %5 {offsets = [1, 0], sizes = [1, 128], strides = [1, 1]} : vector<2x128xf32> to vector<1x128xf32>
    %13 = vector.broadcast %11 : vector<8x1xf32> to vector<8x128xf32>
    %14 = vector.broadcast %12 : vector<1x128xf32> to vector<8x128xf32>
    %15 = arith.mulf %13, %14 : vector<8x128xf32>
    %16 = arith.addf %10, %15 : vector<8x128xf32>
    %17 = vector.broadcast %0 : vector<1x128xf32> to vector<8x128xf32>
    %18 = arith.addf %16, %17 : vector<8x128xf32>
    %cst = arith.constant 0.000000e+00 : f32
    %19 = vector.broadcast %cst : f32 to vector<8x128xf32>
    %20 = arith.maximumf %18, %19 : vector<8x128xf32>
    %c0_11 = arith.constant 0 : index
    %c0_12 = arith.constant 0 : index
    %21 = vector.load %arg5[%c0_11, %c0_12] : memref<128x128xf32, #tpu.memory_space<vmem>>, vector<128x128xf32>
    %cst_13 = arith.constant dense<0.000000e+00> : vector<8x128xf32>
    %22 = tpu.matmul %20, %21, %cst_13 {dimension_numbers = #tpu.dot_dimension_numbers<[1], [0], [0], [1], [0, 0, 1, 1], [], []>} : vector<8x128xf32>, vector<128x128xf32>, vector<8x128xf32> -> vector<8x128xf32>
    %23 = vector.broadcast %1 : vector<1x128xf32> to vector<8x128xf32>
    %24 = arith.addf %22, %23 : vector<8x128xf32>
    %cst_14 = arith.constant 0.000000e+00 : f32
    %25 = vector.broadcast %cst_14 : f32 to vector<8x128xf32>
    %26 = arith.maximumf %24, %25 : vector<8x128xf32>
    %c0_15 = arith.constant 0 : index
    %c0_16 = arith.constant 0 : index
    %27 = vector.load %arg1[%c0_15, %c0_16] : memref<8x4xf32, #tpu.memory_space<vmem>>, vector<8x4xf32>
    %c0_17 = arith.constant 0 : index
    %c0_18 = arith.constant 0 : index
    %28 = vector.load %arg7[%c0_17, %c0_18] : memref<4x128xf32, #tpu.memory_space<vmem>>, vector<4x128xf32>
    %29 = vector.extract_strided_slice %27 {offsets = [0, 0], sizes = [8, 1], strides = [1, 1]} : vector<8x4xf32> to vector<8x1xf32>
    %30 = vector.extract_strided_slice %28 {offsets = [0, 0], sizes = [1, 128], strides = [1, 1]} : vector<4x128xf32> to vector<1x128xf32>
    %31 = vector.broadcast %29 : vector<8x1xf32> to vector<8x128xf32>
    %32 = vector.broadcast %30 : vector<1x128xf32> to vector<8x128xf32>
    %33 = arith.mulf %31, %32 : vector<8x128xf32>
    %34 = vector.broadcast %2 : vector<1x128xf32> to vector<8x128xf32>
    %35 = arith.addf %34, %33 : vector<8x128xf32>
    %36 = vector.extract_strided_slice %27 {offsets = [0, 1], sizes = [8, 1], strides = [1, 1]} : vector<8x4xf32> to vector<8x1xf32>
    %37 = vector.extract_strided_slice %28 {offsets = [1, 0], sizes = [1, 128], strides = [1, 1]} : vector<4x128xf32> to vector<1x128xf32>
    %38 = vector.broadcast %36 : vector<8x1xf32> to vector<8x128xf32>
    %39 = vector.broadcast %37 : vector<1x128xf32> to vector<8x128xf32>
    %40 = arith.mulf %38, %39 : vector<8x128xf32>
    %41 = arith.addf %35, %40 : vector<8x128xf32>
    %42 = vector.extract_strided_slice %27 {offsets = [0, 2], sizes = [8, 1], strides = [1, 1]} : vector<8x4xf32> to vector<8x1xf32>
    %43 = vector.extract_strided_slice %28 {offsets = [2, 0], sizes = [1, 128], strides = [1, 1]} : vector<4x128xf32> to vector<1x128xf32>
    %44 = vector.broadcast %42 : vector<8x1xf32> to vector<8x128xf32>
    %45 = vector.broadcast %43 : vector<1x128xf32> to vector<8x128xf32>
    %46 = arith.mulf %44, %45 : vector<8x128xf32>
    %47 = arith.addf %41, %46 : vector<8x128xf32>
    %48 = vector.extract_strided_slice %27 {offsets = [0, 3], sizes = [8, 1], strides = [1, 1]} : vector<8x4xf32> to vector<8x1xf32>
    %49 = vector.extract_strided_slice %28 {offsets = [3, 0], sizes = [1, 128], strides = [1, 1]} : vector<4x128xf32> to vector<1x128xf32>
    %50 = vector.broadcast %48 : vector<8x1xf32> to vector<8x128xf32>
    %51 = vector.broadcast %49 : vector<1x128xf32> to vector<8x128xf32>
    %52 = arith.mulf %50, %51 : vector<8x128xf32>
    %53 = arith.addf %47, %52 : vector<8x128xf32>
    %54 = arith.addf %53, %26 : vector<8x128xf32>
    %cst_19 = arith.constant 0.000000e+00 : f32
    %55 = vector.broadcast %cst_19 : f32 to vector<8x128xf32>
    %56 = arith.maximumf %54, %55 : vector<8x128xf32>
    %57 = arith.addf %56, %26 : vector<8x128xf32>
    %c0_20 = arith.constant 0 : index
    %c0_21 = arith.constant 0 : index
    %58 = vector.load %arg9[%c0_20, %c0_21] : memref<128x128xf32, #tpu.memory_space<vmem>>, vector<128x128xf32>
    %cst_22 = arith.constant dense<0.000000e+00> : vector<8x128xf32>
    %59 = tpu.matmul %57, %58, %cst_22 {dimension_numbers = #tpu.dot_dimension_numbers<[1], [0], [0], [1], [0, 0, 1, 1], [], []>} : vector<8x128xf32>, vector<128x128xf32>, vector<8x128xf32> -> vector<8x128xf32>
    %60 = vector.broadcast %3 : vector<1x128xf32> to vector<8x128xf32>
    %61 = arith.addf %59, %60 : vector<8x128xf32>
    %62 = arith.addf %61, %26 : vector<8x128xf32>
    %cst_23 = arith.constant 0.000000e+00 : f32
    %63 = vector.broadcast %cst_23 : f32 to vector<8x128xf32>
    %64 = arith.maximumf %62, %63 : vector<8x128xf32>
    %65 = arith.addf %64, %26 : vector<8x128xf32>
    %c0_24 = arith.constant 0 : index
    %c0_25 = arith.constant 0 : index
    %66 = vector.load %arg11[%c0_24, %c0_25] : memref<128x4xf32, #tpu.memory_space<vmem>>, vector<128x4xf32>
    %cst_26 = arith.constant dense<0.000000e+00> : vector<8x4xf32>
    %67 = tpu.matmul %65, %66, %cst_26 {dimension_numbers = #tpu.dot_dimension_numbers<[1], [0], [0], [1], [0, 0, 1, 1], [], []>} : vector<8x128xf32>, vector<128x4xf32>, vector<8x4xf32> -> vector<8x4xf32>
    %c0_27 = arith.constant 0 : index
    %c0_28 = arith.constant 0 : index
    %68 = vector.load %arg12[%c0_27, %c0_28] : memref<1x4xf32, #tpu.memory_space<vmem>>, vector<1x4xf32>
    %69 = vector.broadcast %68 : vector<1x4xf32> to vector<8x4xf32>
    %70 = arith.addf %67, %69 : vector<8x4xf32>
    %c0_29 = arith.constant 0 : index
    %c0_30 = arith.constant 0 : index
    %71 = vector.load %arg13[%c0_29, %c0_30] : memref<128x4xf32, #tpu.memory_space<vmem>>, vector<128x4xf32>
    %cst_31 = arith.constant dense<0.000000e+00> : vector<8x4xf32>
    %72 = tpu.matmul %65, %71, %cst_31 {dimension_numbers = #tpu.dot_dimension_numbers<[1], [0], [0], [1], [0, 0, 1, 1], [], []>} : vector<8x128xf32>, vector<128x4xf32>, vector<8x4xf32> -> vector<8x4xf32>
    %c0_32 = arith.constant 0 : index
    %c0_33 = arith.constant 0 : index
    %73 = vector.load %arg14[%c0_32, %c0_33] : memref<1x4xf32, #tpu.memory_space<vmem>>, vector<1x4xf32>
    %74 = vector.broadcast %73 : vector<1x4xf32> to vector<8x4xf32>
    %75 = arith.addf %72, %74 : vector<8x4xf32>
    %c0_34 = arith.constant 0 : index
    %c0_35 = arith.constant 0 : index
    %76 = vector.load %arg15[%c0_34, %c0_35] : memref<8x4xf32, #tpu.memory_space<vmem>>, vector<8x4xf32>
    tpu.vector_store %arg15[%c0_34, %c0_35], %70 {strides = array<i32>} : memref<8x4xf32, #tpu.memory_space<vmem>>, vector<8x4xf32>,
    %77 = math.tanh %75 : vector<8x4xf32>
    %c0_36 = arith.constant 0 : index
    %c0_37 = arith.constant 0 : index
    %78 = vector.load %arg16[%c0_36, %c0_37] : memref<8x4xf32, #tpu.memory_space<vmem>>, vector<8x4xf32>
    tpu.vector_store %arg16[%c0_36, %c0_37], %77 {strides = array<i32>} : memref<8x4xf32, #tpu.memory_space<vmem>>, vector<8x4xf32>,
    return
  }
  func.func @transform_0(%arg0: i32) -> (i32, i32) {
    %c0_i32 = arith.constant 0 : i32
    %c0_i32_0 = arith.constant 0 : i32
    return %arg0, %c0_i32 : i32, i32
  }
  func.func @transform_1(%arg0: i32) -> (i32, i32) {
    %c0_i32 = arith.constant 0 : i32
    %c0_i32_0 = arith.constant 0 : i32
    return %arg0, %c0_i32 : i32, i32
  }
  func.func @transform_2(%arg0: i32) -> (i32, i32) {
    %c0_i32 = arith.constant 0 : i32
    %c0_i32_0 = arith.constant 0 : i32
    %c0_i32_1 = arith.constant 0 : i32
    return %c0_i32, %c0_i32_0 : i32, i32
  }
  func.func @transform_3(%arg0: i32) -> (i32, i32) {
    %c0_i32 = arith.constant 0 : i32
    %c0_i32_0 = arith.constant 0 : i32
    %c0_i32_1 = arith.constant 0 : i32
    return %c0_i32, %c0_i32_0 : i32, i32
  }
  func.func @transform_4(%arg0: i32) -> (i32, i32) {
    %c0_i32 = arith.constant 0 : i32
    %c0_i32_0 = arith.constant 0 : i32
    %c0_i32_1 = arith.constant 0 : i32
    return %c0_i32, %c0_i32_0 : i32, i32
  }
  func.func @transform_5(%arg0: i32) -> (i32, i32) {
    %c0_i32 = arith.constant 0 : i32
    %c0_i32_0 = arith.constant 0 : i32
    %c0_i32_1 = arith.constant 0 : i32
    return %c0_i32, %c0_i32_0 : i32, i32
  }
  func.func @transform_6(%arg0: i32) -> (i32, i32) {
    %c0_i32 = arith.constant 0 : i32
    %c0_i32_0 = arith.constant 0 : i32
    %c0_i32_1 = arith.constant 0 : i32
    return %c0_i32, %c0_i32_0 : i32, i32
  }
  func.func @transform_7(%arg0: i32) -> (i32, i32) {
    %c0_i32 = arith.constant 0 : i32
    %c0_i32_0 = arith.constant 0 : i32
    %c0_i32_1 = arith.constant 0 : i32
    return %c0_i32, %c0_i32_0 : i32, i32
  }
  func.func @transform_8(%arg0: i32) -> (i32, i32) {
    %c0_i32 = arith.constant 0 : i32
    %c0_i32_0 = arith.constant 0 : i32
    %c0_i32_1 = arith.constant 0 : i32
    return %c0_i32, %c0_i32_0 : i32, i32
  }
  func.func @transform_9(%arg0: i32) -> (i32, i32) {
    %c0_i32 = arith.constant 0 : i32
    %c0_i32_0 = arith.constant 0 : i32
    %c0_i32_1 = arith.constant 0 : i32
    return %c0_i32, %c0_i32_0 : i32, i32
  }
  func.func @transform_10(%arg0: i32) -> (i32, i32) {
    %c0_i32 = arith.constant 0 : i32
    %c0_i32_0 = arith.constant 0 : i32
    %c0_i32_1 = arith.constant 0 : i32
    return %c0_i32, %c0_i32_0 : i32, i32
  }
  func.func @transform_11(%arg0: i32) -> (i32, i32) {
    %c0_i32 = arith.constant 0 : i32
    %c0_i32_0 = arith.constant 0 : i32
    %c0_i32_1 = arith.constant 0 : i32
    return %c0_i32, %c0_i32_0 : i32, i32
  }
  func.func @transform_12(%arg0: i32) -> (i32, i32) {
    %c0_i32 = arith.constant 0 : i32
    %c0_i32_0 = arith.constant 0 : i32
    %c0_i32_1 = arith.constant 0 : i32
    return %c0_i32, %c0_i32_0 : i32, i32
  }
  func.func @transform_13(%arg0: i32) -> (i32, i32) {
    %c0_i32 = arith.constant 0 : i32
    %c0_i32_0 = arith.constant 0 : i32
    %c0_i32_1 = arith.constant 0 : i32
    return %c0_i32, %c0_i32_0 : i32, i32
  }
  func.func @transform_14(%arg0: i32) -> (i32, i32) {
    %c0_i32 = arith.constant 0 : i32
    %c0_i32_0 = arith.constant 0 : i32
    return %arg0, %c0_i32 : i32, i32
  }
  func.func @transform_15(%arg0: i32) -> (i32, i32) {
    %c0_i32 = arith.constant 0 : i32
    %c0_i32_0 = arith.constant 0 : i32
    return %arg0, %c0_i32 : i32, i32
  }
}

</mosaic_0001>

<llo_original>
// kernel: tpu_custom_call.1
$region0: #{tpu_custom_call.1}
  #allocation0 [shape = 'u32[]', space=smem, size = 0x4, offset = 0x4, fixed_abs, tag = 'smem constant byte address 0x4 - core index']
  #allocation1 [shape = 'u32[72,128]{1,0:T(1,128)}', space=vmem, size = 0x9000, scoped, tag = 'internal scratch']
  %s0 = inlined_call_operand.vmem [shape: f32[8,4], index: 0, kind: input, shape index: {}]
  %s1 = inlined_call_operand.vmem [shape: f32[8,2], index: 1, kind: input, shape index: {}]
  %s2 = inlined_call_operand.vmem [shape: f32[2,128], index: 2, kind: input, shape index: {}]
  %s3 = inlined_call_operand.vmem [shape: f32[1,128], index: 3, kind: input, shape index: {}]
  %s4 = inlined_call_operand.vmem [shape: f32[128,128], index: 4, kind: input, shape index: {}]
  %s5 = inlined_call_operand.vmem [shape: f32[1,128], index: 5, kind: input, shape index: {}]
  %s6 = inlined_call_operand.vmem [shape: f32[4,128], index: 6, kind: input, shape index: {}]
  %s7 = inlined_call_operand.vmem [shape: f32[1,128], index: 7, kind: input, shape index: {}]
  %s8 = inlined_call_operand.vmem [shape: f32[128,128], index: 8, kind: input, shape index: {}]
  %s9 = inlined_call_operand.vmem [shape: f32[1,128], index: 9, kind: input, shape index: {}]
  %s10 = inlined_call_operand.vmem [shape: f32[128,4], index: 10, kind: input, shape index: {}]
  %s11 = inlined_call_operand.vmem [shape: f32[1,4], index: 11, kind: input, shape index: {}]
  %s12 = inlined_call_operand.vmem [shape: f32[128,4], index: 12, kind: input, shape index: {}]
  %s13 = inlined_call_operand.vmem [shape: f32[1,4], index: 13, kind: input, shape index: {}]
  %s14 = inlined_call_operand.vmem [shape: f32[8,4], index: 14, kind: output, shape index: {0}]
  %s15 = inlined_call_operand.vmem [shape: f32[8,4], index: 15, kind: output, shape index: {1}]
  %16 = xla_tuple %s14, %s15
  %s17 = sld [smem:[#allocation0]]
  $region74: #{tpu_custom_call.1} parent=0
    _
  %s19 = ssub.s32 1, %s17
  %s20 = scalar_select 0, %s19, %s17
  // Predicated region
  $region2: #{tpu_custom_call.1} parent=0 // pred_check
    _
  $region3: #{tpu_custom_call.1} parent=0 // pred_check_branch
    %22 = sbr.rel (0) target = $region5
  $region4: #{tpu_custom_call.1} parent=0 // pred_region
    _
  $region5: #{tpu_custom_call.1} parent=0 // pred_fallthru
    _
  // Predicated region
  $region6: #{tpu_custom_call.1} parent=0 // pred_check
    _
  $region7: #{tpu_custom_call.1} parent=0 // pred_check_branch
    %24 = sbr.rel (0) target = $region9
  $region8: #{tpu_custom_call.1} parent=0 // pred_region
    _
  $region9: #{tpu_custom_call.1} parent=0 // pred_fallthru
    _
  // Predicated region
  $region10: #{tpu_custom_call.1} parent=0 // pred_check
    _
  $region11: #{tpu_custom_call.1} parent=0 // pred_check_branch
    %26 = sbr.rel (0) target = $region13
  $region12: #{tpu_custom_call.1} parent=0 // pred_region
    _
  $region13: #{tpu_custom_call.1} parent=0 // pred_fallthru
    _
  // Predicated region
  $region14: #{tpu_custom_call.1} parent=0 // pred_check
    _
  $region15: #{tpu_custom_call.1} parent=0 // pred_check_branch
    %28 = sbr.rel (0) target = $region17
  $region16: #{tpu_custom_call.1} parent=0 // pred_region
    _
  $region17: #{tpu_custom_call.1} parent=0 // pred_fallthru
    _
  // Predicated region
  $region18: #{tpu_custom_call.1} parent=0 // pred_check
    _
  $region19: #{tpu_custom_call.1} parent=0 // pred_check_branch
    %30 = sbr.rel (0) target = $region21
  $region20: #{tpu_custom_call.1} parent=0 // pred_region
    _
  $region21: #{tpu_custom_call.1} parent=0 // pred_fallthru
    _
  // Predicated region
  $region22: #{tpu_custom_call.1} parent=0 // pred_check
    _
  $region23: #{tpu_custom_call.1} parent=0 // pred_check_branch
    %32 = sbr.rel (0) target = $region25
  $region24: #{tpu_custom_call.1} parent=0 // pred_region
    _
  $region25: #{tpu_custom_call.1} parent=0 // pred_fallthru
    _
  // Predicated region
  $region26: #{tpu_custom_call.1} parent=0 // pred_check
    _
  $region27: #{tpu_custom_call.1} parent=0 // pred_check_branch
    %34 = sbr.rel (0) target = $region29
  $region28: #{tpu_custom_call.1} parent=0 // pred_region
    _
  $region29: #{tpu_custom_call.1} parent=0 // pred_fallthru
    _
  // Predicated region
  $region30: #{tpu_custom_call.1} parent=0 // pred_check
    _
  $region31: #{tpu_custom_call.1} parent=0 // pred_check_branch
    %36 = sbr.rel (0) target = $region33
  $region32: #{tpu_custom_call.1} parent=0 // pred_region
    _
  $region33: #{tpu_custom_call.1} parent=0 // pred_fallthru
    _
  // Predicated region
  $region34: #{tpu_custom_call.1} parent=0 // pred_check
    _
  $region35: #{tpu_custom_call.1} parent=0 // pred_check_branch
    %38 = sbr.rel (0) target = $region37
  $region36: #{tpu_custom_call.1} parent=0 // pred_region
    _
  $region37: #{tpu_custom_call.1} parent=0 // pred_fallthru
    _
  // Predicated region
  $region38: #{tpu_custom_call.1} parent=0 // pred_check
    _
  $region39: #{tpu_custom_call.1} parent=0 // pred_check_branch
    %40 = sbr.rel (0) target = $region41
  $region40: #{tpu_custom_call.1} parent=0 // pred_region
    _
  $region41: #{tpu_custom_call.1} parent=0 // pred_fallthru
    _
  // Predicated region
  $region42: #{tpu_custom_call.1} parent=0 // pred_check
    _
  $region43: #{tpu_custom_call.1} parent=0 // pred_check_branch
    %42 = sbr.rel (0) target = $region45
  $region44: #{tpu_custom_call.1} parent=0 // pred_region
    _
  $region45: #{tpu_custom_call.1} parent=0 // pred_fallthru
    _
  // Predicated region
  $region46: #{tpu_custom_call.1} parent=0 // pred_check
    _
  $region47: #{tpu_custom_call.1} parent=0 // pred_check_branch
    %44 = sbr.rel (0) target = $region49
  $region48: #{tpu_custom_call.1} parent=0 // pred_region
    _
  $region49: #{tpu_custom_call.1} parent=0 // pred_fallthru
    _
  // Predicated region
  $region50: #{tpu_custom_call.1} parent=0 // pred_check
    _
  $region51: #{tpu_custom_call.1} parent=0 // pred_check_branch
    %46 = sbr.rel (0) target = $region53
  $region52: #{tpu_custom_call.1} parent=0 // pred_region
    _
  $region53: #{tpu_custom_call.1} parent=0 // pred_fallthru
    _
  // Predicated region
  $region54: #{tpu_custom_call.1} parent=0 // pred_check
    _
  $region55: #{tpu_custom_call.1} parent=0 // pred_check_branch
    %48 = sbr.rel (0) target = $region57
  $region56: #{tpu_custom_call.1} parent=0 // pred_region
    _
  $region57: #{tpu_custom_call.1} parent=0 // pred_fallthru
    _
  %v49 = vld [vmem:[%s3] sm:$0x1]
  %v50 = vld [vmem:[%s5] sm:$0x1]
  %v51 = vld [vmem:[%s7] sm:$0x1]
  %v52 = vld [vmem:[%s9] sm:$0x1]
  %v53 = vld [vmem:[%s1] sm:$0xff]
  %v54 = vld [vmem:[%s2] sm:$0x3]
  %56 = vset.pattern.permute.xlu0 0
  %57 = vperm.xlu0 %56, %v53
  %v58 = vpop.permute.xlu0 %57
  %v60 = vperm.slane %v54, 0
  %v61 = vmul.f32 %v58, %v60
  %62 = vset.pattern.permute.xlu0 1
  %63 = vperm.xlu0 %62, %v53
  %v64 = vpop.permute.xlu0 %63
  %v66 = vperm.slane %v54, 1
  %v67 = vmul.f32 %v64, %v66
  %v68 = vadd.f32 %v61, %v67
  %v70 = vperm.slane %v49, 0
  %v72 = vadd.f32 %v68, %v70
  %v73 = vmax.f32 %v72, 0.0
  %v74 = vld [vmem:[%s4] sm:$0xff]
  %v75 = vld [vmem:[%s4 + $0x8] sm:$0xff]
  %v76 = vld [vmem:[%s4 + $0x10] sm:$0xff]
  %v77 = vld [vmem:[%s4 + $0x18] sm:$0xff]
  %v78 = vld [vmem:[%s4 + $0x20] sm:$0xff]
  %v79 = vld [vmem:[%s4 + $0x28] sm:$0xff]
  %v80 = vld [vmem:[%s4 + $0x30] sm:$0xff]
  %v81 = vld [vmem:[%s4 + $0x38] sm:$0xff]
  %v82 = vld [vmem:[%s4 + $0x40] sm:$0xff]
  %v83 = vld [vmem:[%s4 + $0x48] sm:$0xff]
  %v84 = vld [vmem:[%s4 + $0x50] sm:$0xff]
  %v85 = vld [vmem:[%s4 + $0x58] sm:$0xff]
  %v86 = vld [vmem:[%s4 + $0x60] sm:$0xff]
  %v87 = vld [vmem:[%s4 + $0x68] sm:$0xff]
  %v88 = vld [vmem:[%s4 + $0x70] sm:$0xff]
  %v89 = vld [vmem:[%s4 + $0x78] sm:$0xff]
  %v91 = vperm.slane %v50, 0
  %93 = vmatpush.msra.mxu0 %v89
  %94 = vmatpush.msra.mxu0 %v88
  %95 = vmatpush.msra.mxu0 %v87
  %96 = vmatpush.msra.mxu0 %v86
  %97 = vmatpush.msra.mxu0 %v85
  %98 = vmatpush.msra.mxu0 %v84
  %99 = vmatpush.msra.mxu0 %v83
  %100 = vmatpush.msra.mxu0 %v82
  %101 = vmatpush.msra.mxu0 %v81
  %102 = vmatpush.msra.mxu0 %v80
  %103 = vmatpush.msra.mxu0 %v79
  %104 = vmatpush.msra.mxu0 %v78
  %105 = vmatpush.msra.mxu0 %v77
  %106 = vmatpush.msra.mxu0 %v76
  %107 = vmatpush.msra.mxu0 %v75
  %108 = vmatpush.msra.mxu0 %v74
  %109 = vmatmul.f32.gmra.mxu0 %v73
  %v110 = vpop.f32.mrf.mxu0
  %v111 = vadd.f32 %v91, %v110
  %112 = vdwg.mxu0
  %v113 = vmax.f32 %v111, 0.0
  %v114 = vld [vmem:[%s0] sm:$0xff]
  %v115 = vld [vmem:[%s6] sm:$0xf]
  %117 = vset.pattern.permute.xlu0 0
  %118 = vperm.xlu0 %117, %v114
  %v119 = vpop.permute.xlu0 %118
  %v121 = vperm.slane %v115, 0
  %v122 = vmul.f32 %v119, %v121
  %v124 = vperm.slane %v51, 0
  %v126 = vadd.f32 %v124, %v122
  %127 = vset.pattern.permute.xlu0 1
  %128 = vperm.xlu0 %127, %v114
  %v129 = vpop.permute.xlu0 %128
  %v131 = vperm.slane %v115, 1
  %v132 = vmul.f32 %v129, %v131
  %v133 = vadd.f32 %v126, %v132
  %134 = vset.pattern.permute.xlu0 2
  %135 = vperm.xlu0 %134, %v114
  %v136 = vpop.permute.xlu0 %135
  %v138 = vperm.slane %v115, 2
  %v139 = vmul.f32 %v136, %v138
  %v140 = vadd.f32 %v133, %v139
  %141 = vset.pattern.permute.xlu0 3
  %142 = vperm.xlu0 %141, %v114
  %v143 = vpop.permute.xlu0 %142
  %v145 = vperm.slane %v115, 3
  %v146 = vmul.f32 %v143, %v145
  %v147 = vadd.f32 %v140, %v146
  %v148 = vadd.f32 %v147, %v113
  %v149 = vmax.f32 %v148, 0.0
  %v150 = vadd.f32 %v149, %v113
  %v151 = vld [vmem:[%s8] sm:$0xff]
  %v152 = vld [vmem:[%s8 + $0x8] sm:$0xff]
  %v153 = vld [vmem:[%s8 + $0x10] sm:$0xff]
  %v154 = vld [vmem:[%s8 + $0x18] sm:$0xff]
  %v155 = vld [vmem:[%s8 + $0x20] sm:$0xff]
  %v156 = vld [vmem:[%s8 + $0x28] sm:$0xff]
  %v157 = vld [vmem:[%s8 + $0x30] sm:$0xff]
  %v158 = vld [vmem:[%s8 + $0x38] sm:$0xff]
  %v159 = vld [vmem:[%s8 + $0x40] sm:$0xff]
  %v160 = vld [vmem:[%s8 + $0x48] sm:$0xff]
  %v161 = vld [vmem:[%s8 + $0x50] sm:$0xff]
  %v162 = vld [vmem:[%s8 + $0x58] sm:$0xff]
  %v163 = vld [vmem:[%s8 + $0x60] sm:$0xff]
  %v164 = vld [vmem:[%s8 + $0x68] sm:$0xff]
  %v165 = vld [vmem:[%s8 + $0x70] sm:$0xff]
  %v166 = vld [vmem:[%s8 + $0x78] sm:$0xff]
  %v168 = vperm.slane %v52, 0
  %170 = vmatpush.msra.mxu0 %v166
  %171 = vmatpush.msra.mxu0 %v165
  %172 = vmatpush.msra.mxu0 %v164
  %173 = vmatpush.msra.mxu0 %v163
  %174 = vmatpush.msra.mxu0 %v162
  %175 = vmatpush.msra.mxu0 %v161
  %176 = vmatpush.msra.mxu0 %v160
  %177 = vmatpush.msra.mxu0 %v159
  %178 = vmatpush.msra.mxu0 %v158
  %179 = vmatpush.msra.mxu0 %v157
  %180 = vmatpush.msra.mxu0 %v156
  %181 = vmatpush.msra.mxu0 %v155
  %182 = vmatpush.msra.mxu0 %v154
  %183 = vmatpush.msra.mxu0 %v153
  %184 = vmatpush.msra.mxu0 %v152
  %185 = vmatpush.msra.mxu0 %v151
  %186 = vmatmul.f32.gmra.mxu0 %v150
  %v187 = vpop.f32.mrf.mxu0
  %v188 = vadd.f32 %v168, %v187
  %189 = vdwg.mxu0
  %v190 = vadd.f32 %v188, %v113
  %v191 = vmax.f32 %v190, 0.0
  %v192 = vadd.f32 %v191, %v113
  %v193 = vld [vmem:[%s10] sm:$0xff]
  %v194 = vld [vmem:[%s10 + $0x8] sm:$0xff]
  %v195 = vld [vmem:[%s10 + $0x10] sm:$0xff]
  %v196 = vld [vmem:[%s10 + $0x18] sm:$0xff]
  %v197 = vld [vmem:[%s10 + $0x20] sm:$0xff]
  %v198 = vld [vmem:[%s10 + $0x28] sm:$0xff]
  %v199 = vld [vmem:[%s10 + $0x30] sm:$0xff]
  %v200 = vld [vmem:[%s10 + $0x38] sm:$0xff]
  %v201 = vld [vmem:[%s10 + $0x40] sm:$0xff]
  %v202 = vld [vmem:[%s10 + $0x48] sm:$0xff]
  %v203 = vld [vmem:[%s10 + $0x50] sm:$0xff]
  %v204 = vld [vmem:[%s10 + $0x58] sm:$0xff]
  %v205 = vld [vmem:[%s10 + $0x60] sm:$0xff]
  %v206 = vld [vmem:[%s10 + $0x68] sm:$0xff]
  %v207 = vld [vmem:[%s10 + $0x70] sm:$0xff]
  %v208 = vld [vmem:[%s10 + $0x78] sm:$0xff]
  %v209 = vld [vmem:[%s11] sm:$0x1]
  %v211 = vperm.slane %v209, 0
  %213 = vmatpush.msra.mxu0 %v208
  %214 = vmatpush.msra.mxu0 %v207
  %215 = vmatpush.msra.mxu0 %v206
  %216 = vmatpush.msra.mxu0 %v205
  %217 = vmatpush.msra.mxu0 %v204
  %218 = vmatpush.msra.mxu0 %v203
  %219 = vmatpush.msra.mxu0 %v202
  %220 = vmatpush.msra.mxu0 %v201
  %221 = vmatpush.msra.mxu0 %v200
  %222 = vmatpush.msra.mxu0 %v199
  %223 = vmatpush.msra.mxu0 %v198
  %224 = vmatpush.msra.mxu0 %v197
  %225 = vmatpush.msra.mxu0 %v196
  %226 = vmatpush.msra.mxu0 %v195
  %227 = vmatpush.msra.mxu0 %v194
  %228 = vmatpush.msra.mxu0 %v193
  %229 = vmatmul.f32.gmra.mxu0 %v192
  %v230 = vpop.f32.mrf.mxu0
  %v231 = vadd.f32 %v211, %v230
  %232 = vdwg.mxu0
  %v233 = vld [vmem:[%s12] sm:$0xff]
  %v234 = vld [vmem:[%s12 + $0x8] sm:$0xff]
  %v235 = vld [vmem:[%s12 + $0x10] sm:$0xff]
  %v236 = vld [vmem:[%s12 + $0x18] sm:$0xff]
  %v237 = vld [vmem:[%s12 + $0x20] sm:$0xff]
  %v238 = vld [vmem:[%s12 + $0x28] sm:$0xff]
  %v239 = vld [vmem:[%s12 + $0x30] sm:$0xff]
  %v240 = vld [vmem:[%s12 + $0x38] sm:$0xff]
  %v241 = vld [vmem:[%s12 + $0x40] sm:$0xff]
  %v242 = vld [vmem:[%s12 + $0x48] sm:$0xff]
  %v243 = vld [vmem:[%s12 + $0x50] sm:$0xff]
  %v244 = vld [vmem:[%s12 + $0x58] sm:$0xff]
  %v245 = vld [vmem:[%s12 + $0x60] sm:$0xff]
  %v246 = vld [vmem:[%s12 + $0x68] sm:$0xff]
  %v247 = vld [vmem:[%s12 + $0x70] sm:$0xff]
  %v248 = vld [vmem:[%s12 + $0x78] sm:$0xff]
  %v249 = vld [vmem:[%s13] sm:$0x1]
  %v251 = vperm.slane %v249, 0
  %253 = vmatpush.msra.mxu0 %v248
  %254 = vmatpush.msra.mxu0 %v247
  %255 = vmatpush.msra.mxu0 %v246
  %256 = vmatpush.msra.mxu0 %v245
  %257 = vmatpush.msra.mxu0 %v244
  %258 = vmatpush.msra.mxu0 %v243
  %259 = vmatpush.msra.mxu0 %v242
  %260 = vmatpush.msra.mxu0 %v241
  %261 = vmatpush.msra.mxu0 %v240
  %262 = vmatpush.msra.mxu0 %v239
  %263 = vmatpush.msra.mxu0 %v238
  %264 = vmatpush.msra.mxu0 %v237
  %265 = vmatpush.msra.mxu0 %v236
  %266 = vmatpush.msra.mxu0 %v235
  %267 = vmatpush.msra.mxu0 %v234
  %268 = vmatpush.msra.mxu0 %v233
  %269 = vmatmul.f32.gmra.mxu0 %v192
  %v270 = vpop.f32.mrf.mxu0
  %v271 = vadd.f32 %v251, %v270
  %272 = vdwg.mxu0
  %vm273 = vcmask 31744
  %274 = vst.msk [vmem:[%s14] sm:$0xff] %vm273, %v231
  %v275 = vtanh.pop %v271
  %276 = vst.msk [vmem:[%s15] sm:$0xff] %vm273, %v275
  // Predicated region
  $region58: #{tpu_custom_call.1} parent=0 // pred_check
    _
  $region59: #{tpu_custom_call.1} parent=0 // pred_check_branch
    %278 = sbr.rel (0) target = $region61
  $region60: #{tpu_custom_call.1} parent=0 // pred_region
    _
  $region61: #{tpu_custom_call.1} parent=0 // pred_fallthru
    _
  // Predicated region
  $region62: #{tpu_custom_call.1} parent=0 // pred_check
    _
  $region63: #{tpu_custom_call.1} parent=0 // pred_check_branch
    %280 = sbr.rel (0) target = $region65
  $region64: #{tpu_custom_call.1} parent=0 // pred_region
    _
  $region65: #{tpu_custom_call.1} parent=0 // pred_fallthru
    _
  // Predicated region
  $region66: #{tpu_custom_call.1} parent=0 // pred_check
    _
  $region67: #{tpu_custom_call.1} parent=0 // pred_check_branch
    %282 = sbr.rel (0) target = $region69
  $region68: #{tpu_custom_call.1} parent=0 // pred_region
    _
  $region69: #{tpu_custom_call.1} parent=0 // pred_fallthru
    _
  // Predicated region
  $region70: #{tpu_custom_call.1} parent=0 // pred_check
    _
  $region71: #{tpu_custom_call.1} parent=0 // pred_check_branch
    %284 = sbr.rel (0) target = $region73
  $region72: #{tpu_custom_call.1} parent=0 // pred_region
    _
  $region73: #{tpu_custom_call.1} parent=0 // pred_fallthru
    _

</llo_original>
